<compile_context>
chip_gen: v7x
topology: tpu7x:2x2x1
jax: 0.10.0
libtpu: 0.0.40
codegen_flags: <defaults>
</compile_context>

<pallas_src>
import functools
import math

import jax
import jax.numpy as jnp
from jax.experimental import pallas as pl
from jax.experimental.pallas import tpu as pltpu


# ---------------------------------------------------------------------------
# Hardware / tiling helpers
# ---------------------------------------------------------------------------
_DEFAULT_VMEM_BYTES = 128 * 1024 * 1024


def _round_up(x: int, m: int) -> int:
    return (x + m - 1) // m * m


@functools.lru_cache(maxsize=1)
def _tpu_budget():
    """(max_block_bytes, vmem_limit_bytes), generation-aware."""
    vmem_bytes = _DEFAULT_VMEM_BYTES
    try:
        info = pltpu.get_tpu_info()
        vmem_bytes = int(getattr(info, "vmem_capacity_bytes", _DEFAULT_VMEM_BYTES))
    except Exception:
        pass
    if vmem_bytes <= 64 * 1024 * 1024:
        # v7x-class: 64 MiB physical per TensorCore; ~4x block bytes live
        # (in + out, double-buffered) must stay well inside it.
        max_block = 6 * 1024 * 1024
    else:
        # v5e / v6e: 128 MiB physical.
        max_block = 8 * 1024 * 1024
    # Explicit scoped-VMEM limit so big tiles are allowed (v5e default 16 MiB),
    # while keeping plenty of physical headroom.
    vmem_limit = int(min(vmem_bytes // 2, 64 * 1024 * 1024))
    return max_block, vmem_limit


@functools.lru_cache(maxsize=1)
def _num_tensorcores_per_chip() -> int:
    try:
        kind = jax.devices()[0].device_kind.lower()
        if "v7" in kind:
            return 2
    except Exception:
        pass
    return 1


def _choose_feature_tile(n_features: int, rows: int, itemsize: int,
                         max_block_bytes: int, max_tile: int = 16384) -> int:
    """Largest multiple-of-128 lane tile with rows*tile*itemsize <= budget."""
    f_pad = _round_up(max(n_features, 1), 128)
    denom = max(rows * itemsize, 1)
    cap = (max_block_bytes // denom) // 128 * 128
    # Never let the cap collapse to 0 for huge `rows`; callers bound `rows`
    # (batch tiling in fit/forward, fused-path fallback in fit_transform).
    cap = max(cap, 128)
    tile = max(128, min(f_pad, cap, max_tile))
    # Split only to feed a second TensorCore on multi-core chips (v7x).
    # On single-TC chips the grid is a serial loop: splitting just doubles
    # per-step overhead with zero parallel benefit.
    if _num_tensorcores_per_chip() >= 2 and pl.cdiv(n_features, tile) < 2 and f_pad > 128:
        tile = max(128, _round_up(f_pad // 2, 128))
    return tile


def _choose_batch_tile(batch: int, max_rows: int = 256) -> int:
    """Full batch if small, otherwise a multiple-of-8 sublane tile."""
    return batch if batch <= max_rows else max_rows


# ---------------------------------------------------------------------------
# Kernels
# ---------------------------------------------------------------------------
def _make_fit_kernel(eps: float, scale: float, batch: int, tb: int, need_mask: bool):
    """Batch-tiled running min/max; grid = (F_tiles, B_tiles), batch last."""

    def fit_kernel(x_ref, dmin_ref, drange_ref, inv_ref, mn_sc, mx_sc):
        bi = pl.program_id(1)

        @pl.when(bi == 0)
        def _init():
            mn_sc[...] = jnp.full_like(mn_sc, jnp.inf)
            mx_sc[...] = jnp.full_like(mx_sc, -jnp.inf)

        x = x_ref[...]                                     # (tb, tile_f), native dtype
        if need_mask:
            # Ragged last batch block: rows past `batch` hold stale VMEM data;
            # neutralize them before the reduction.
            row = jax.lax.broadcasted_iota(jnp.int32, x.shape, 0)
            valid = row < (batch - bi * tb)
            x_mn = jnp.where(valid, x, jnp.array(jnp.inf, dtype=x.dtype))
            x_mx = jnp.where(valid, x, jnp.array(-jnp.inf, dtype=x.dtype))
        else:
            x_mn = x_mx = x

        # min/max are exact in the native dtype; only the clamp/divide need f32.
        mn_sc[...] = jnp.minimum(
            mn_sc[...], jnp.min(x_mn, axis=0, keepdims=True).astype(jnp.float32))
        mx_sc[...] = jnp.maximum(
            mx_sc[...], jnp.max(x_mx, axis=0, keepdims=True).astype(jnp.float32))

        @pl.when(bi == pl.num_programs(1) - 1)
        def _finalize():
            mn = mn_sc[...]
            rng = jnp.maximum(mx_sc[...] - mn, eps)
            dmin_ref[...] = mn.astype(dmin_ref.dtype)
            drange_ref[...] = rng.astype(drange_ref.dtype)
            inv_ref[...] = (scale / rng).astype(inv_ref.dtype)   # divide hoisted to fit

    return fit_kernel


def _make_forward_kernel(min_val: float):
    def forward_kernel(x_ref, dmin_ref, inv_ref, o_ref):
        dmin = dmin_ref[...].astype(jnp.float32)            # (1, tile_f)
        inv = inv_ref[...]                                   # (1, tile_f) f32, precomputed
        x = x_ref[...].astype(jnp.float32)                   # (tb, tile_f)
        o_ref[...] = ((x - dmin) * inv + min_val).astype(o_ref.dtype)
    return forward_kernel


def _make_fit_transform_kernel(eps: float, min_val: float, scale: float):
    """Fused single HBM read of x: full batch resident per feature tile."""

    def fit_transform_kernel(x_ref, dmin_ref, drange_ref, inv_ref, o_ref):
        x = x_ref[...]                                       # (B, tile_f)
        mn = jnp.min(x, axis=0, keepdims=True).astype(jnp.float32)
        mx = jnp.max(x, axis=0, keepdims=True).astype(jnp.float32)
        rng = jnp.maximum(mx - mn, eps)
        inv = scale / rng                                    # one divide per feature
        dmin_ref[...] = mn.astype(dmin_ref.dtype)
        drange_ref[...] = rng.astype(drange_ref.dtype)
        inv_ref[...] = inv.astype(inv_ref.dtype)
        o_ref[...] = ((x.astype(jnp.float32) - mn) * inv + min_val).astype(o_ref.dtype)

    return fit_transform_kernel


# ---------------------------------------------------------------------------
# Wrapper (MinMaxScaler with dim=0, feature_range=(a, b), eps=1e-12)
# ---------------------------------------------------------------------------
class MinMaxScalerPallas:
    DEFAULT_EPS = 1e-12

    def __init__(self, feature_range=(0.0, 1.0), eps=None):
        a, b = map(float, feature_range)
        if b <= a:
            raise ValueError("feature_range must satisfy max > min")
        self.min_val = a
        self.max_val = b
        self.eps = float(eps) if eps is not None else self.DEFAULT_EPS
        self.data_min = None        # (1, F), input dtype (like PyTorch buffer)
        self.data_range = None      # (1, F), input dtype
        self._inv_range = None      # (1, F), float32: (b-a)/data_range
        self._feat_shape = None

    # -- helpers ------------------------------------------------------------
    @staticmethod
    def _flatten(x_nchw):
        B = x_nchw.shape[0]
        F = math.prod(x_nchw.shape[1:])
        return x_nchw.reshape(B, F), B, F

    # -- fit: min/max reduction over batch (dim=0), batch-tiled --------------
    def fit(self, x_nchw):
        x2d, B, F = self._flatten(x_nchw)
        itemsize = x2d.dtype.itemsize
        max_block, vmem_limit = _tpu_budget()

        tb = _choose_batch_tile(B)
        tile_f = _choose_feature_tile(F, rows=tb, itemsize=itemsize,
                                      max_block_bytes=max_block)
        grid = (pl.cdiv(F, tile_f), pl.cdiv(B, tb))          # reduction (batch) last
        need_mask = (B % tb) != 0
        scale = self.max_val - self.min_val

        cost = pl.CostEstimate(flops=2 * B * F, transcendentals=0,
                               bytes_accessed=B * F * itemsize + 3 * F * 4)

        dmin, drange, inv = pl.pallas_call(
            _make_fit_kernel(self.eps, scale, B, tb, need_mask),
            out_shape=(
                jax.ShapeDtypeStruct((1, F), x2d.dtype),
                jax.ShapeDtypeStruct((1, F), x2d.dtype),
                jax.ShapeDtypeStruct((1, F), jnp.float32),
            ),
            grid_spec=pltpu.PrefetchScalarGridSpec(
                num_scalar_prefetch=0,
                grid=grid,
                in_specs=[pl.BlockSpec((tb, tile_f), lambda fi, bi: (bi, fi))],
                out_specs=(
                    pl.BlockSpec((1, tile_f), lambda fi, bi: (0, fi)),
                    pl.BlockSpec((1, tile_f), lambda fi, bi: (0, fi)),
                    pl.BlockSpec((1, tile_f), lambda fi, bi: (0, fi)),
                ),
                scratch_shapes=[pltpu.VMEM((1, tile_f), jnp.float32),
                                pltpu.VMEM((1, tile_f), jnp.float32)],
            ),
            compiler_params=pltpu.CompilerParams(
                dimension_semantics=("parallel", "arbitrary"),
                vmem_limit_bytes=vmem_limit),
            cost_estimate=cost,
        )(x2d)

        self.data_min = dmin
        self.data_range = drange
        self._inv_range = inv
        self._feat_shape = x_nchw.shape[1:]
        return self

    # -- forward: elementwise affine rescale (no divide in the hot loop) -----
    def forward(self, x_nchw):
        if self.data_min is None:
            raise RuntimeError("call fit() or fit_transform() first")
        x2d, B, F = self._flatten(x_nchw)
        assert F == self.data_min.shape[1], "feature shape mismatch vs. fit()"
        if self._inv_range is None:   # buffers set externally -> derive once
            self._inv_range = (self.max_val - self.min_val) / jnp.maximum(
                self.data_range.astype(jnp.float32), self.eps)

        itemsize = x2d.dtype.itemsize
        max_block, vmem_limit = _tpu_budget()
        tb = _choose_batch_tile(B)
        tile_f = _choose_feature_tile(F, rows=tb, itemsize=itemsize,
                                      max_block_bytes=max_block)
        # Feature axis OUTER, batch INNER: the (1, tile_f) broadcast buffers
        # keep the same block index across consecutive steps (no re-DMA).
        grid = (pl.cdiv(F, tile_f), pl.cdiv(B, tb))

        cost = pl.CostEstimate(flops=3 * B * F, transcendentals=0,
                               bytes_accessed=2 * B * F * itemsize + 2 * F * 4)

        y2d = pl.pallas_call(
            _make_forward_kernel(self.min_val),
            out_shape=jax.ShapeDtypeStruct((B, F), x2d.dtype),
            grid_spec=pltpu.PrefetchScalarGridSpec(
                num_scalar_prefetch=0,
                grid=grid,
                in_specs=[
                    pl.BlockSpec((tb, tile_f), lambda fi, bi: (bi, fi)),
                    pl.BlockSpec((1, tile_f), lambda fi, bi: (0, fi)),
                    pl.BlockSpec((1, tile_f), lambda fi, bi: (0, fi)),
                ],
                out_specs=pl.BlockSpec((tb, tile_f), lambda fi, bi: (bi, fi)),
            ),
            compiler_params=pltpu.CompilerParams(
                dimension_semantics=("parallel", "parallel"),
                vmem_limit_bytes=vmem_limit),
            cost_estimate=cost,
        )(x2d, self.data_min, self._inv_range)
        return y2d.reshape(x_nchw.shape)

    __call__ = forward

    # -- fused fit + forward: reads x from HBM exactly once when viable ------
    def fit_transform(self, x_nchw):
        x2d, B, F = self._flatten(x_nchw)
        itemsize = x2d.dtype.itemsize
        max_block, vmem_limit = _tpu_budget()
        f_pad = _round_up(max(F, 1), 128)

        # Fused path only if the FULL batch stays VMEM-resident at a
        # lane-efficient tile width (>=512 lanes, or all of F if smaller).
        # Otherwise two efficient streaming passes beat one fused pass at
        # narrow tiles (reading x twice well > reading it once badly).
        cap = (max_block // max(B * itemsize, 1)) // 128 * 128
        if cap < min(512, f_pad):
            self.fit(x_nchw)
            return self.forward(x_nchw)

        tile_f = _choose_feature_tile(F, rows=B, itemsize=itemsize,
                                      max_block_bytes=max_block)
        grid = (pl.cdiv(F, tile_f),)
        scale = self.max_val - self.min_val

        cost = pl.CostEstimate(flops=5 * B * F, transcendentals=0,
                               bytes_accessed=2 * B * F * itemsize + 3 * F * 4)

        dmin, drange, inv, y2d = pl.pallas_call(
            _make_fit_transform_kernel(self.eps, self.min_val, scale),
            out_shape=(
                jax.ShapeDtypeStruct((1, F), x2d.dtype),
                jax.ShapeDtypeStruct((1, F), x2d.dtype),
                jax.ShapeDtypeStruct((1, F), jnp.float32),
                jax.ShapeDtypeStruct((B, F), x2d.dtype),
            ),
            grid_spec=pltpu.PrefetchScalarGridSpec(
                num_scalar_prefetch=0,
                grid=grid,
                in_specs=[pl.BlockSpec((B, tile_f), lambda j: (0, j))],
                out_specs=(
                    pl.BlockSpec((1, tile_f), lambda j: (0, j)),
                    pl.BlockSpec((1, tile_f), lambda j: (0, j)),
                    pl.BlockSpec((1, tile_f), lambda j: (0, j)),
                    pl.BlockSpec((B, tile_f), lambda j: (0, j)),
                ),
            ),
            compiler_params=pltpu.CompilerParams(
                dimension_semantics=("parallel",),
                vmem_limit_bytes=vmem_limit),
            cost_estimate=cost,
        )(x2d)

        self.data_min = dmin
        self.data_range = drange
        self._inv_range = inv
        self._feat_shape = x_nchw.shape[1:]
        return y2d.reshape(x_nchw.shape)


# ---------------------------------------------------------------------------
def _reference(x, a, b, eps):
    d_min = jnp.min(x, axis=0, keepdims=True)
    d_max = jnp.max(x, axis=0, keepdims=True)
    d_range = jnp.maximum(d_max - d_min, eps)
    return (x - d_min) / d_range * (b - a) + a, d_min, d_range


if __name__ == "__main__":
    key = jax.random.PRNGKey(0)

    # --- small NCHW case: fused fit_transform + separate forward ------------
    B, C, H, W = 2, 4, 16, 16
    x = jax.random.normal(key, (B, C, H, W), dtype=jnp.float32) * 3.0 + 1.5

    scaler = MinMaxScalerPallas(feature_range=(0.0, 1.0))
    y_fused = jax.block_until_ready(scaler.fit_transform(x))   # single HBM read of x
    y_fwd = jax.block_until_ready(scaler.forward(x))           # uses fitted buffers

    y_ref, d_min, d_range = _reference(x, scaler.min_val, scaler.max_val, scaler.eps)
    assert y_fused.shape == x.shape and y_fused.dtype == x.dtype
    assert jnp.allclose(y_fused, y_ref, atol=1e-5, rtol=1e-5), "fit_transform mismatch"
    assert jnp.allclose(y_fwd, y_ref, atol=1e-5, rtol=1e-5), "forward mismatch"
    assert jnp.allclose(scaler.data_min, d_min.reshape(1, -1), atol=1e-6, rtol=1e-6)
    assert jnp.allclose(scaler.data_range, d_range.reshape(1, -1), atol=1e-6, rtol=1e-6)

    # --- larger-batch case: exercises the batch-tiled accumulator fit -------
    key2 = jax.random.PRNGKey(0)
    x2 = jax.random.normal(key2, (300, 4, 8, 8), dtype=jnp.float32) * 0.7 - 2.0
    scaler2 = MinMaxScalerPallas(feature_range=(-1.0, 1.0))
    scaler2.fit(x2)                                            # grid=(F_tiles, B_tiles), ragged mask
    y2 = jax.block_until_ready(scaler2.forward(x2))
    y2_ref, d_min2, d_range2 = _reference(x2, scaler2.min_val, scaler2.max_val, scaler2.eps)
    assert jnp.allclose(y2, y2_ref, atol=1e-5, rtol=1e-5), "batch-tiled fit/forward mismatch"
    assert jnp.allclose(scaler2.data_min, d_min2.reshape(1, -1), atol=1e-6, rtol=1e-6)
    assert jnp.allclose(scaler2.data_range, d_range2.reshape(1, -1), atol=1e-6, rtol=1e-6)

    print("KERNEL_OK")
</pallas_src>

<mosaic_0001>
module attributes {stable_mosaic.version = 11 : i64} {
  func.func @fit_transform_kernel(%arg0: i32, %arg1: memref<2x1024xf32, #tpu.memory_space<vmem>>, %arg2: memref<1x1024xf32, #tpu.memory_space<vmem>>, %arg3: memref<1x1024xf32, #tpu.memory_space<vmem>>, %arg4: memref<1x1024xf32, #tpu.memory_space<vmem>>, %arg5: memref<2x1024xf32, #tpu.memory_space<vmem>>) attributes {dimension_semantics = [#tpu.dimension_semantics<parallel>], iteration_bounds = array<i64: 1>, scalar_prefetch = 0 : i64, scratch_operands = 0 : i64, tpu.core_type = #tpu.core_type<tc>, window_params = [{transform_indices = @transform_0, window_bounds = array<i64: 2, 1024>}, {transform_indices = @transform_1, window_bounds = array<i64: 1, 1024>}, {transform_indices = @transform_2, window_bounds = array<i64: 1, 1024>}, {transform_indices = @transform_3, window_bounds = array<i64: 1, 1024>}, {transform_indices = @transform_4, window_bounds = array<i64: 2, 1024>}]} {
    %c0 = arith.constant 0 : index
    %c0_0 = arith.constant 0 : index
    %0 = vector.load %arg1[%c0, %c0_0] : memref<2x1024xf32, #tpu.memory_space<vmem>>, vector<2x1024xf32>
    %cst = arith.constant dense<0x7F800000> : vector<1024xf32>
    %1 = vector.multi_reduction <minimumf>, %0, %cst [0] : vector<2x1024xf32> to vector<1024xf32>
    %2 = vector.shape_cast %1 : vector<1024xf32> to vector<1x1024xf32>
    %cst_1 = arith.constant dense<0xFF800000> : vector<1024xf32>
    %3 = vector.multi_reduction <maximumf>, %0, %cst_1 [0] : vector<2x1024xf32> to vector<1024xf32>
    %4 = vector.shape_cast %3 : vector<1024xf32> to vector<1x1024xf32>
    %5 = arith.subf %4, %2 : vector<1x1024xf32>
    %cst_2 = arith.constant 9.99999996E-13 : f32
    %6 = vector.broadcast %cst_2 : f32 to vector<1x1024xf32>
    %7 = arith.maximumf %5, %6 : vector<1x1024xf32>
    %cst_3 = arith.constant 1.000000e+00 : f32
    %8 = vector.broadcast %cst_3 : f32 to vector<1x1024xf32>
    %9 = arith.divf %8, %7 : vector<1x1024xf32>
    %c0_4 = arith.constant 0 : index
    %c0_5 = arith.constant 0 : index
    %10 = vector.load %arg2[%c0_4, %c0_5] : memref<1x1024xf32, #tpu.memory_space<vmem>>, vector<1x1024xf32>
    tpu.vector_store %arg2[%c0_4, %c0_5], %2 {strides = array<i32>} : memref<1x1024xf32, #tpu.memory_space<vmem>>, vector<1x1024xf32>,
    %c0_6 = arith.constant 0 : index
    %c0_7 = arith.constant 0 : index
    %11 = vector.load %arg3[%c0_6, %c0_7] : memref<1x1024xf32, #tpu.memory_space<vmem>>, vector<1x1024xf32>
    tpu.vector_store %arg3[%c0_6, %c0_7], %7 {strides = array<i32>} : memref<1x1024xf32, #tpu.memory_space<vmem>>, vector<1x1024xf32>,
    %c0_8 = arith.constant 0 : index
    %c0_9 = arith.constant 0 : index
    %12 = vector.load %arg4[%c0_8, %c0_9] : memref<1x1024xf32, #tpu.memory_space<vmem>>, vector<1x1024xf32>
    tpu.vector_store %arg4[%c0_8, %c0_9], %9 {strides = array<i32>} : memref<1x1024xf32, #tpu.memory_space<vmem>>, vector<1x1024xf32>,
    %13 = vector.broadcast %2 : vector<1x1024xf32> to vector<2x1024xf32>
    %14 = arith.subf %0, %13 : vector<2x1024xf32>
    %15 = vector.broadcast %9 : vector<1x1024xf32> to vector<2x1024xf32>
    %16 = arith.mulf %14, %15 : vector<2x1024xf32>
    %cst_10 = arith.constant 0.000000e+00 : f32
    %17 = vector.broadcast %cst_10 : f32 to vector<2x1024xf32>
    %18 = arith.addf %16, %17 : vector<2x1024xf32>
    %c0_11 = arith.constant 0 : index
    %c0_12 = arith.constant 0 : index
    %19 = vector.load %arg5[%c0_11, %c0_12] : memref<2x1024xf32, #tpu.memory_space<vmem>>, vector<2x1024xf32>
    tpu.vector_store %arg5[%c0_11, %c0_12], %18 {strides = array<i32>} : memref<2x1024xf32, #tpu.memory_space<vmem>>, vector<2x1024xf32>,
    return
  }
  func.func @transform_0(%arg0: i32) -> (i32, i32) {
    %c0_i32 = arith.constant 0 : i32
    %c0_i32_0 = arith.constant 0 : i32
    return %c0_i32, %arg0 : i32, i32
  }
  func.func @transform_1(%arg0: i32) -> (i32, i32) {
    %c0_i32 = arith.constant 0 : i32
    %c0_i32_0 = arith.constant 0 : i32
    return %c0_i32, %arg0 : i32, i32
  }
  func.func @transform_2(%arg0: i32) -> (i32, i32) {
    %c0_i32 = arith.constant 0 : i32
    %c0_i32_0 = arith.constant 0 : i32
    return %c0_i32, %arg0 : i32, i32
  }
  func.func @transform_3(%arg0: i32) -> (i32, i32) {
    %c0_i32 = arith.constant 0 : i32
    %c0_i32_0 = arith.constant 0 : i32
    return %c0_i32, %arg0 : i32, i32
  }
  func.func @transform_4(%arg0: i32) -> (i32, i32) {
    %c0_i32 = arith.constant 0 : i32
    %c0_i32_0 = arith.constant 0 : i32
    return %c0_i32, %arg0 : i32, i32
  }
}

</mosaic_0001>

<llo_original>
// kernel: tpu_custom_call.1
$region0: #{tpu_custom_call.1}
  #allocation0 [shape = 'u32[]', space=smem, size = 0x4, offset = 0x4, fixed_abs, tag = 'smem constant byte address 0x4 - core index']
  #allocation1 [shape = 'u32[144,128]{1,0:T(1,128)}', space=vmem, size = 0x12000, scoped, tag = 'internal scratch']
  %s0 = inlined_call_operand.hbm [shape: f32[2,1024], index: 0, kind: input, shape index: {}]
  %s1 = inlined_call_operand.hbm [shape: f32[1,1024], index: 1, kind: output, shape index: {0}]
  %s2 = inlined_call_operand.hbm [shape: f32[1,1024], index: 2, kind: output, shape index: {1}]
  %s3 = inlined_call_operand.hbm [shape: f32[1,1024], index: 3, kind: output, shape index: {2}]
  %s4 = inlined_call_operand.hbm [shape: f32[2,1024], index: 4, kind: output, shape index: {3}]
  %5 = xla_tuple %s1, %s2, %s3, %s4
  %s6 = sld [smem:[#allocation0]]
  $region42: #{tpu_custom_call.1} parent=0
    _
  %s8 = ssub.s32 1, %s6
  %s9 = scalar_select 0, %s8, %s6
  $region1: #{tpu_custom_call.1} parent=0
    #allocation2 [shape = 'u8[8192]{0}', space=vmem, size = 0x2000, scoped, tag = 'input window, operand 0, single buffered']
    #allocation3 [shape = 's32[1]{0}', space=sflag, size = 0x4, scoped, tag = 'scoped memory for tpu_custom_call.1']
    #allocation4 [shape = 's32[1]{0}', space=sflag, size = 0x4, scoped, tag = 'scoped memory for tpu_custom_call.1']
    #allocation5 [shape = 'u8[4096]{0}', space=vmem, size = 0x1000, scoped, tag = 'output window, operand 0, single buffered']
    #allocation6 [shape = 'u8[4096]{0}', space=vmem, size = 0x1000, scoped, tag = 'output window, operand 1, single buffered']
    #allocation7 [shape = 's32[1]{0}', space=sflag, size = 0x4, scoped, tag = 'scoped memory for tpu_custom_call.1']
    #allocation8 [shape = 'u8[4096]{0}', space=vmem, size = 0x1000, scoped, tag = 'output window, operand 2, single buffered']
    #allocation9 [shape = 'u8[8192]{0}', space=vmem, size = 0x2000, scoped, tag = 'output window, operand 3, single buffered']
    #allocation10 [shape = 's32[1]{0}', space=sflag, size = 0x4, scoped, tag = 'scoped memory for tpu_custom_call.1']
    %10 = vsyncpa [#allocation3], 0
    %11 = vsyncpa [#allocation4], 0
    %12 = vsyncpa [#allocation7], 0
    %13 = vsyncpa [#allocation10], 0
    // Predicated region
    $region2: #{tpu_custom_call.1} parent=1 // pred_check
      _
    $region3: #{tpu_custom_call.1} parent=1 // pred_check_branch
      %15 = sbr.rel (0) target = $region5
    $region4: #{tpu_custom_call.1} parent=1 // pred_region
      %s17 = ssub.s32 256, 256
      %18 = vsyncadd [#allocation3], %s17
      %s20 = sshll.u32 [#allocation2], 4
      %s21 = int_to_ptr.vmem [resolvable:$true] %s20
      %23 = dma.hbm_to_vmem [thread:$0]  %s0, 256, %s21, [#allocation3]
    $region5: #{tpu_custom_call.1} parent=1 // pred_fallthru
      _
    // Predicated region
    $region6: #{tpu_custom_call.1} parent=1 // pred_check
      _
    $region7: #{tpu_custom_call.1} parent=1 // pred_check_branch
      %25 = sbr.rel (0) target = $region9
    $region8: #{tpu_custom_call.1} parent=1 // pred_region
      %26 = dma.done [#allocation3], 256
    $region9: #{tpu_custom_call.1} parent=1 // pred_fallthru
      _
    %v27 = vld [vmem:[#allocation2] sm:$0xff]
    %v28 = vld [vmem:[#allocation2 + $0x8] sm:$0xff]
    %v31 = vcombine.high %v27, %v27
    %v33 = vunpack.c.l.s4 1983009808
    %v34 = vunpack.c.0.s8 %v33
    %v35 = vlaneseq
    %v36 = vshrl.u32 %v35, 7
    %v37 = vsub.s32 %v34, %v36
    %v38 = vrot.slane %v27, %v37
    %v40 = vunpack.c.l.s4 1983009808
    %v41 = vunpack.c.0.s8 %v40
    %v42 = vlaneseq
    %v43 = vshrl.u32 %v42, 7
    %v44 = vsub.s32 %v41, %v43
    %v45 = vrot.slane %v31, %v44
    %v46 = vcombine.high %v38, %v38
    %v47 = vcombine.high %v45, %v45
    %v48 = vcombine.high %v28, %v28
    %v50 = vunpack.c.l.s4 1983009808
    %v51 = vunpack.c.0.s8 %v50
    %v52 = vlaneseq
    %v53 = vshrl.u32 %v52, 7
    %v54 = vsub.s32 %v51, %v53
    %v55 = vrot.slane %v28, %v54
    %v57 = vunpack.c.l.s4 1983009808
    %v58 = vunpack.c.0.s8 %v57
    %v59 = vlaneseq
    %v60 = vshrl.u32 %v59, 7
    %v61 = vsub.s32 %v58, %v60
    %v62 = vrot.slane %v48, %v61
    %v63 = vcombine.high %v55, %v55
    %v64 = vcombine.high %v62, %v62
    %vm73 = vcmask 1041408
    %v74 = vsel %vm73, %v38, inf
    %v75 = vrot.slane %v74, 4
    %v76 = vmin.f32 %v74, %v75
    %v77 = vrot.slane %v76, 2
    %v78 = vmin.f32 %v76, %v77
    %v79 = vrot.slane %v78, 1
    %v80 = vmin.f32 %v78, %v79
    %v81 = vsel %vm73, %v46, inf
    %v82 = vrot.slane %v81, 4
    %v83 = vmin.f32 %v81, %v82
    %v84 = vrot.slane %v83, 2
    %v85 = vmin.f32 %v83, %v84
    %v86 = vrot.slane %v85, 1
    %v87 = vmin.f32 %v85, %v86
    %v88 = vsel %vm73, %v45, inf
    %v89 = vrot.slane %v88, 4
    %v90 = vmin.f32 %v88, %v89
    %v91 = vrot.slane %v90, 2
    %v92 = vmin.f32 %v90, %v91
    %v93 = vrot.slane %v92, 1
    %v94 = vmin.f32 %v92, %v93
    %v95 = vsel %vm73, %v47, inf
    %v96 = vrot.slane %v95, 4
    %v97 = vmin.f32 %v95, %v96
    %v98 = vrot.slane %v97, 2
    %v99 = vmin.f32 %v97, %v98
    %v100 = vrot.slane %v99, 1
    %v101 = vmin.f32 %v99, %v100
    %v102 = vsel %vm73, %v55, inf
    %v103 = vrot.slane %v102, 4
    %v104 = vmin.f32 %v102, %v103
    %v105 = vrot.slane %v104, 2
    %v106 = vmin.f32 %v104, %v105
    %v107 = vrot.slane %v106, 1
    %v108 = vmin.f32 %v106, %v107
    %v109 = vsel %vm73, %v63, inf
    %v110 = vrot.slane %v109, 4
    %v111 = vmin.f32 %v109, %v110
    %v112 = vrot.slane %v111, 2
    %v113 = vmin.f32 %v111, %v112
    %v114 = vrot.slane %v113, 1
    %v115 = vmin.f32 %v113, %v114
    %v116 = vsel %vm73, %v62, inf
    %v117 = vrot.slane %v116, 4
    %v118 = vmin.f32 %v116, %v117
    %v119 = vrot.slane %v118, 2
    %v120 = vmin.f32 %v118, %v119
    %v121 = vrot.slane %v120, 1
    %v122 = vmin.f32 %v120, %v121
    %v123 = vsel %vm73, %v64, inf
    %v124 = vrot.slane %v123, 4
    %v125 = vmin.f32 %v123, %v124
    %v126 = vrot.slane %v125, 2
    %v127 = vmin.f32 %v125, %v126
    %v128 = vrot.slane %v127, 1
    %v129 = vmin.f32 %v127, %v128
    %v130 = vsel %vm73, %v38, -inf
    %v131 = vrot.slane %v130, 4
    %v132 = vmax.f32 %v130, %v131
    %v133 = vrot.slane %v132, 2
    %v134 = vmax.f32 %v132, %v133
    %v135 = vrot.slane %v134, 1
    %v136 = vmax.f32 %v134, %v135
    %v137 = vsel %vm73, %v46, -inf
    %v138 = vrot.slane %v137, 4
    %v139 = vmax.f32 %v137, %v138
    %v140 = vrot.slane %v139, 2
    %v141 = vmax.f32 %v139, %v140
    %v142 = vrot.slane %v141, 1
    %v143 = vmax.f32 %v141, %v142
    %v144 = vsel %vm73, %v45, -inf
    %v145 = vrot.slane %v144, 4
    %v146 = vmax.f32 %v144, %v145
    %v147 = vrot.slane %v146, 2
    %v148 = vmax.f32 %v146, %v147
    %v149 = vrot.slane %v148, 1
    %v150 = vmax.f32 %v148, %v149
    %v151 = vsel %vm73, %v47, -inf
    %v152 = vrot.slane %v151, 4
    %v153 = vmax.f32 %v151, %v152
    %v154 = vrot.slane %v153, 2
    %v155 = vmax.f32 %v153, %v154
    %v156 = vrot.slane %v155, 1
    %v157 = vmax.f32 %v155, %v156
    %v158 = vsel %vm73, %v55, -inf
    %v159 = vrot.slane %v158, 4
    %v160 = vmax.f32 %v158, %v159
    %v161 = vrot.slane %v160, 2
    %v162 = vmax.f32 %v160, %v161
    %v163 = vrot.slane %v162, 1
    %v164 = vmax.f32 %v162, %v163
    %v165 = vsel %vm73, %v63, -inf
    %v166 = vrot.slane %v165, 4
    %v167 = vmax.f32 %v165, %v166
    %v168 = vrot.slane %v167, 2
    %v169 = vmax.f32 %v167, %v168
    %v170 = vrot.slane %v169, 1
    %v171 = vmax.f32 %v169, %v170
    %v172 = vsel %vm73, %v62, -inf
    %v173 = vrot.slane %v172, 4
    %v174 = vmax.f32 %v172, %v173
    %v175 = vrot.slane %v174, 2
    %v176 = vmax.f32 %v174, %v175
    %v177 = vrot.slane %v176, 1
    %v178 = vmax.f32 %v176, %v177
    %v179 = vsel %vm73, %v64, -inf
    %v180 = vrot.slane %v179, 4
    %v181 = vmax.f32 %v179, %v180
    %v182 = vrot.slane %v181, 2
    %v183 = vmax.f32 %v181, %v182
    %v184 = vrot.slane %v183, 1
    %v185 = vmax.f32 %v183, %v184
    %v186 = vsub.f32 %v136, %v80
    %v187 = vsub.f32 %v143, %v87
    %v188 = vsub.f32 %v150, %v94
    %v189 = vsub.f32 %v157, %v101
    %v190 = vsub.f32 %v164, %v108
    %v191 = vsub.f32 %v171, %v115
    %v192 = vsub.f32 %v178, %v122
    %v193 = vsub.f32 %v185, %v129
    %v194 = vmax.f32 %v186, 1e-12
    %v195 = vmax.f32 %v187, 1e-12
    %v196 = vmax.f32 %v188, 1e-12
    %v197 = vmax.f32 %v189, 1e-12
    %v198 = vmax.f32 %v190, 1e-12
    %v199 = vmax.f32 %v191, 1e-12
    %v200 = vmax.f32 %v192, 1e-12
    %v201 = vmax.f32 %v193, 1e-12
    %v202 = vrcp.pop %v194
    %v203 = vmul.f32 1.0, %v202
    %v204 = vrcp.pop %v195
    %v205 = vmul.f32 1.0, %v204
    %v206 = vrcp.pop %v196
    %v207 = vmul.f32 1.0, %v206
    %v208 = vrcp.pop %v197
    %v209 = vmul.f32 1.0, %v208
    %v210 = vrcp.pop %v198
    %v211 = vmul.f32 1.0, %v210
    %v212 = vrcp.pop %v199
    %v213 = vmul.f32 1.0, %v212
    %v214 = vrcp.pop %v200
    %v215 = vmul.f32 1.0, %v214
    %v216 = vrcp.pop %v201
    %v217 = vmul.f32 1.0, %v216
    %v226 = vcombine.low %v80, %v87
    %v227 = vcombine.low %v94, %v101
    %v228 = vcombine.low %v108, %v115
    %v229 = vcombine.low %v122, %v129
    %v231 = vunpack.c.l.s4 1966171168
    %v232 = vunpack.c.0.s8 %v231
    %v233 = vlaneseq
    %v234 = vshrl.u32 %v233, 7
    %v235 = vsub.s32 %v232, %v234
    %v236 = vrot.slane %v226, %v235
    %v238 = vunpack.c.l.s4 1966171168
    %v239 = vunpack.c.0.s8 %v238
    %v240 = vlaneseq
    %v241 = vshrl.u32 %v240, 7
    %v242 = vsub.s32 %v239, %v241
    %v243 = vrot.slane %v227, %v242
    %v245 = vunpack.c.l.s4 1966171168
    %v246 = vunpack.c.0.s8 %v245
    %v247 = vlaneseq
    %v248 = vshrl.u32 %v247, 7
    %v249 = vsub.s32 %v246, %v248
    %v250 = vrot.slane %v228, %v249
    %v252 = vunpack.c.l.s4 1966171168
    %v253 = vunpack.c.0.s8 %v252
    %v254 = vlaneseq
    %v255 = vshrl.u32 %v254, 7
    %v256 = vsub.s32 %v253, %v255
    %v257 = vrot.slane %v229, %v256
    %v258 = vcombine.low %v236, %v243
    %v259 = vcombine.low %v250, %v257
    %v261 = vunpack.c.l.s4 1966171168
    %v262 = vunpack.c.0.s8 %v261
    %v263 = vlaneseq
    %v264 = vshrl.u32 %v263, 7
    %v265 = vsub.s32 %v262, %v264
    %v266 = vrot.slane %v258, %v265
    %v268 = vunpack.c.l.s4 1966171168
    %v269 = vunpack.c.0.s8 %v268
    %v270 = vlaneseq
    %v271 = vshrl.u32 %v270, 7
    %v272 = vsub.s32 %v269, %v271
    %v273 = vrot.slane %v259, %v272
    %v274 = vcombine.low %v266, %v273
    %276 = vst [vmem:[#allocation5] sm:$0xff] %v274
    %v285 = vcombine.low %v194, %v195
    %v286 = vcombine.low %v196, %v197
    %v287 = vcombine.low %v198, %v199
    %v288 = vcombine.low %v200, %v201
    %v290 = vunpack.c.l.s4 1966171168
    %v291 = vunpack.c.0.s8 %v290
    %v292 = vlaneseq
    %v293 = vshrl.u32 %v292, 7
    %v294 = vsub.s32 %v291, %v293
    %v295 = vrot.slane %v285, %v294
    %v297 = vunpack.c.l.s4 1966171168
    %v298 = vunpack.c.0.s8 %v297
    %v299 = vlaneseq
    %v300 = vshrl.u32 %v299, 7
    %v301 = vsub.s32 %v298, %v300
    %v302 = vrot.slane %v286, %v301
    %v304 = vunpack.c.l.s4 1966171168
    %v305 = vunpack.c.0.s8 %v304
    %v306 = vlaneseq
    %v307 = vshrl.u32 %v306, 7
    %v308 = vsub.s32 %v305, %v307
    %v309 = vrot.slane %v287, %v308
    %v311 = vunpack.c.l.s4 1966171168
    %v312 = vunpack.c.0.s8 %v311
    %v313 = vlaneseq
    %v314 = vshrl.u32 %v313, 7
    %v315 = vsub.s32 %v312, %v314
    %v316 = vrot.slane %v288, %v315
    %v317 = vcombine.low %v295, %v302
    %v318 = vcombine.low %v309, %v316
    %v320 = vunpack.c.l.s4 1966171168
    %v321 = vunpack.c.0.s8 %v320
    %v322 = vlaneseq
    %v323 = vshrl.u32 %v322, 7
    %v324 = vsub.s32 %v321, %v323
    %v325 = vrot.slane %v317, %v324
    %v327 = vunpack.c.l.s4 1966171168
    %v328 = vunpack.c.0.s8 %v327
    %v329 = vlaneseq
    %v330 = vshrl.u32 %v329, 7
    %v331 = vsub.s32 %v328, %v330
    %v332 = vrot.slane %v318, %v331
    %v333 = vcombine.low %v325, %v332
    %335 = vst [vmem:[#allocation6] sm:$0xff] %v333
    %v344 = vcombine.low %v203, %v205
    %v345 = vcombine.low %v207, %v209
    %v346 = vcombine.low %v211, %v213
    %v347 = vcombine.low %v215, %v217
    %v349 = vunpack.c.l.s4 1966171168
    %v350 = vunpack.c.0.s8 %v349
    %v351 = vlaneseq
    %v352 = vshrl.u32 %v351, 7
    %v353 = vsub.s32 %v350, %v352
    %v354 = vrot.slane %v344, %v353
    %v356 = vunpack.c.l.s4 1966171168
    %v357 = vunpack.c.0.s8 %v356
    %v358 = vlaneseq
    %v359 = vshrl.u32 %v358, 7
    %v360 = vsub.s32 %v357, %v359
    %v361 = vrot.slane %v345, %v360
    %v363 = vunpack.c.l.s4 1966171168
    %v364 = vunpack.c.0.s8 %v363
    %v365 = vlaneseq
    %v366 = vshrl.u32 %v365, 7
    %v367 = vsub.s32 %v364, %v366
    %v368 = vrot.slane %v346, %v367
    %v370 = vunpack.c.l.s4 1966171168
    %v371 = vunpack.c.0.s8 %v370
    %v372 = vlaneseq
    %v373 = vshrl.u32 %v372, 7
    %v374 = vsub.s32 %v371, %v373
    %v375 = vrot.slane %v347, %v374
    %v376 = vcombine.low %v354, %v361
    %v377 = vcombine.low %v368, %v375
    %v379 = vunpack.c.l.s4 1966171168
    %v380 = vunpack.c.0.s8 %v379
    %v381 = vlaneseq
    %v382 = vshrl.u32 %v381, 7
    %v383 = vsub.s32 %v380, %v382
    %v384 = vrot.slane %v376, %v383
    %v386 = vunpack.c.l.s4 1966171168
    %v387 = vunpack.c.0.s8 %v386
    %v388 = vlaneseq
    %v389 = vshrl.u32 %v388, 7
    %v390 = vsub.s32 %v387, %v389
    %v391 = vrot.slane %v377, %v390
    %v392 = vcombine.low %v384, %v391
    %394 = vst [vmem:[#allocation8] sm:$0xff] %v392
    %v396 = vunpack.c.l.s4 1983009808
    %v397 = vunpack.c.0.s8 %v396
    %v398 = vlaneseq
    %v399 = vshrl.u32 %v398, 7
    %v400 = vsub.s32 %v397, %v399
    %v401 = vrot.slane %v226, %v400
    %v403 = vunpack.c.l.s4 1983009808
    %v404 = vunpack.c.0.s8 %v403
    %v405 = vlaneseq
    %v406 = vshrl.u32 %v405, 7
    %v407 = vsub.s32 %v404, %v406
    %v408 = vrot.slane %v227, %v407
    %v409 = vcombine.low %v401, %v408
    %v411 = vunpack.c.l.s4 1983009808
    %v412 = vunpack.c.0.s8 %v411
    %v413 = vlaneseq
    %v414 = vshrl.u32 %v413, 7
    %v415 = vsub.s32 %v412, %v414
    %v416 = vrot.slane %v228, %v415
    %v418 = vunpack.c.l.s4 1983009808
    %v419 = vunpack.c.0.s8 %v418
    %v420 = vlaneseq
    %v421 = vshrl.u32 %v420, 7
    %v422 = vsub.s32 %v419, %v421
    %v423 = vrot.slane %v229, %v422
    %v424 = vcombine.low %v416, %v423
    %v427 = vsub.f32 %v27, %v409
    %v428 = vsub.f32 %v28, %v424
    %v430 = vunpack.c.l.s4 1983009808
    %v431 = vunpack.c.0.s8 %v430
    %v432 = vlaneseq
    %v433 = vshrl.u32 %v432, 7
    %v434 = vsub.s32 %v431, %v433
    %v435 = vrot.slane %v344, %v434
    %v437 = vunpack.c.l.s4 1983009808
    %v438 = vunpack.c.0.s8 %v437
    %v439 = vlaneseq
    %v440 = vshrl.u32 %v439, 7
    %v441 = vsub.s32 %v438, %v440
    %v442 = vrot.slane %v345, %v441
    %v443 = vcombine.low %v435, %v442
    %v445 = vunpack.c.l.s4 1983009808
    %v446 = vunpack.c.0.s8 %v445
    %v447 = vlaneseq
    %v448 = vshrl.u32 %v447, 7
    %v449 = vsub.s32 %v446, %v448
    %v450 = vrot.slane %v346, %v449
    %v452 = vunpack.c.l.s4 1983009808
    %v453 = vunpack.c.0.s8 %v452
    %v454 = vlaneseq
    %v455 = vshrl.u32 %v454, 7
    %v456 = vsub.s32 %v453, %v455
    %v457 = vrot.slane %v347, %v456
    %v458 = vcombine.low %v450, %v457
    %v461 = vmul.f32 %v427, %v443
    %v462 = vmul.f32 %v428, %v458
    %v463 = vadd.f32 %v461, 0.0
    %v464 = vadd.f32 %v462, 0.0
    %465 = vst [vmem:[#allocation9] sm:$0xff] %v463
    %466 = vst [vmem:[#allocation9 + $0x8] sm:$0xff] %v464
    // Predicated region
    $region10: #{tpu_custom_call.1} parent=1 // pred_check
      _
    $region11: #{tpu_custom_call.1} parent=1 // pred_check_branch
      %468 = sbr.rel (0) target = $region13
    $region12: #{tpu_custom_call.1} parent=1 // pred_region
      %s470 = ssub.s32 128, 128
      %471 = vsyncadd [#allocation4], %s470
      %s473 = sshll.u32 [#allocation5], 4
      %s474 = int_to_ptr.vmem [resolvable:$true] %s473
      %476 = dma.vmem_to_hbm [thread:$0]  %s474, 128, %s1, [#allocation4]
    $region13: #{tpu_custom_call.1} parent=1 // pred_fallthru
      _
    // Predicated region
    $region14: #{tpu_custom_call.1} parent=1 // pred_check
      _
    $region15: #{tpu_custom_call.1} parent=1 // pred_check_branch
      %478 = sbr.rel (0) target = $region17
    $region16: #{tpu_custom_call.1} parent=1 // pred_region
      %s480 = ssub.s32 128, 128
      %481 = vsyncadd [#allocation7], %s480
      %s483 = sshll.u32 [#allocation6], 4
      %s484 = int_to_ptr.vmem [resolvable:$true] %s483
      %486 = dma.vmem_to_hbm [thread:$0]  %s484, 128, %s2, [#allocation7]
    $region17: #{tpu_custom_call.1} parent=1 // pred_fallthru
      _
    // Predicated region
    $region18: #{tpu_custom_call.1} parent=1 // pred_check
      _
    $region19: #{tpu_custom_call.1} parent=1 // pred_check_branch
      %488 = sbr.rel (0) target = $region21
    $region20: #{tpu_custom_call.1} parent=1 // pred_region
      %s490 = ssub.s32 128, 128
      %491 = vsyncadd [#allocation7], %s490
      %s493 = sshll.u32 [#allocation8], 4
      %s494 = int_to_ptr.vmem [resolvable:$true] %s493
      %496 = dma.vmem_to_hbm [thread:$0]  %s494, 128, %s3, [#allocation7]
    $region21: #{tpu_custom_call.1} parent=1 // pred_fallthru
      _
    // Predicated region
    $region22: #{tpu_custom_call.1} parent=1 // pred_check
      _
    $region23: #{tpu_custom_call.1} parent=1 // pred_check_branch
      %498 = sbr.rel (0) target = $region25
    $region24: #{tpu_custom_call.1} parent=1 // pred_region
      %s500 = ssub.s32 256, 256
      %501 = vsyncadd [#allocation10], %s500
      %s503 = sshll.u32 [#allocation9], 4
      %s504 = int_to_ptr.vmem [resolvable:$true] %s503
      %506 = dma.vmem_to_hbm [thread:$0]  %s504, 256, %s4, [#allocation10]
    $region25: #{tpu_custom_call.1} parent=1 // pred_fallthru
      _
    // Predicated region
    $region26: #{tpu_custom_call.1} parent=1 // pred_check
      _
    $region27: #{tpu_custom_call.1} parent=1 // pred_check_branch
      %508 = sbr.rel (0) target = $region29
    $region28: #{tpu_custom_call.1} parent=1 // pred_region
      %509 = dma.done [#allocation4], 128
    $region29: #{tpu_custom_call.1} parent=1 // pred_fallthru
      _
    // Predicated region
    $region30: #{tpu_custom_call.1} parent=1 // pred_check
      _
    $region31: #{tpu_custom_call.1} parent=1 // pred_check_branch
      %511 = sbr.rel (0) target = $region33
    $region32: #{tpu_custom_call.1} parent=1 // pred_region
      %512 = dma.done [#allocation7], 128
    $region33: #{tpu_custom_call.1} parent=1 // pred_fallthru
      _
    // Predicated region
    $region34: #{tpu_custom_call.1} parent=1 // pred_check
      _
    $region35: #{tpu_custom_call.1} parent=1 // pred_check_branch
      %514 = sbr.rel (0) target = $region37
    $region36: #{tpu_custom_call.1} parent=1 // pred_region
      %515 = dma.done [#allocation7], 128
    $region37: #{tpu_custom_call.1} parent=1 // pred_fallthru
      _
    // Predicated region
    $region38: #{tpu_custom_call.1} parent=1 // pred_check
      _
    $region39: #{tpu_custom_call.1} parent=1 // pred_check_branch
      %517 = sbr.rel (0) target = $region41
    $region40: #{tpu_custom_call.1} parent=1 // pred_region
      %518 = dma.done [#allocation10], 256
    $region41: #{tpu_custom_call.1} parent=1 // pred_fallthru
      _
    %519 = vsyncpa [#allocation3], 1
    %520 = vsyncpa [#allocation4], 1
    %521 = vsyncpa [#allocation7], 1
    %522 = vsyncpa [#allocation10], 1

</llo_original>
